<compile_context>
chip_gen: v7x
topology: tpu7x:2x2x1
jax: 0.10.0
libtpu: 0.0.40
codegen_flags: <defaults>
</compile_context>

<pallas_src>
import functools
import math

import jax
import jax.numpy as jnp
from jax.experimental import pallas as pl
from jax.experimental.pallas import tpu as pltpu


def _round_up(x, m):
    return (x + m - 1) // m * m


def _cdiv(a, b):
    return (a + b - 1) // b


# ----------------------------------------------------------------------------
# Kernels
# ----------------------------------------------------------------------------

def _ffn_resident_kernel(x_ref, w1_ref, b1_ref, w2_ref, b2_ref, o_ref, *,
                         compute_dtype):
    """Whole W1/W2 resident in VMEM (constant index_maps); one pass per row tile."""
    x = x_ref[...].astype(compute_dtype)
    h = jnp.dot(x, w1_ref[...], preferred_element_type=jnp.float32)
    h = jnp.maximum(h + b1_ref[...], 0.0)
    y = jnp.dot(h.astype(compute_dtype), w2_ref[...],
                preferred_element_type=jnp.float32)
    o_ref[...] = (y + b2_ref[...]).astype(o_ref.dtype)


def _ffn_streamed_kernel(x_ref, w1_ref, b1_ref, w2_ref, b2_ref, o_ref, acc_ref, *,
                         compute_dtype):
    """d_ff reduction as the innermost ('arbitrary') grid axis; f32 accumulator."""
    k = pl.program_id(1)

    @pl.when(k == 0)
    def _():
        acc_ref[...] = jnp.zeros_like(acc_ref)

    x = x_ref[...].astype(compute_dtype)
    h = jnp.dot(x, w1_ref[...], preferred_element_type=jnp.float32)
    h = jnp.maximum(h + b1_ref[...], 0.0)
    acc_ref[...] += jnp.dot(h.astype(compute_dtype), w2_ref[...],
                            preferred_element_type=jnp.float32)

    @pl.when(k == pl.num_programs(1) - 1)
    def _():
        o_ref[...] = (acc_ref[...] + b2_ref[...]).astype(o_ref.dtype)


# ----------------------------------------------------------------------------
# Wrapper
# ----------------------------------------------------------------------------

def position_wise_feed_forward(x, w1, b1, w2, b2, *, block_m=None, block_ff=None,
                               compute_dtype=None, deep_buffer_weights=False):
    """x: (batch, seq, d_model). w1: (d_model, d_ff), b1: (1, d_ff),
    w2: (d_ff, d_model), b2: (1, d_model). Returns (batch, seq, d_model)."""
    batch, seq, d_model = x.shape
    d_ff = w1.shape[1]
    m = batch * seq
    x2d = x.reshape(m, d_model)

    # ---- per-generation hardware query (VMEM budget, megacore heuristic) ----
    try:
        vmem_cap = int(getattr(pltpu.get_tpu_info(), "vmem_capacity_bytes",
                               128 * 1024 * 1024))
    except Exception:
        vmem_cap = 128 * 1024 * 1024
    small_vmem = vmem_cap <= 64 * 1024 * 1024          # v7x-like: 64 MiB/TC, 2 TCs
    vmem_budget = max(min(int(vmem_cap * 0.82), vmem_cap - (16 << 20)), 32 << 20)

    # ---- MXU compute dtype: bf16 operands + f32 accumulation for big f32 FFNs ----
    if compute_dtype is None:
        if x.dtype == jnp.float32 and d_model >= 256 and d_ff >= 256:
            compute_dtype = jnp.bfloat16
        else:
            compute_dtype = x.dtype
    compute_dtype = jnp.dtype(compute_dtype)
    w1 = w1.astype(compute_dtype)
    w2 = w2.astype(compute_dtype)
    b1 = b1.astype(jnp.float32)            # biases added in f32 (exact)
    b2 = b2.astype(jnp.float32)

    x_bytes = x.dtype.itemsize
    out_bytes = x.dtype.itemsize
    w_bytes = compute_dtype.itemsize

    if block_m is None:
        # 128 MiB-VMEM chips (v5e/v6e): big row tiles to beat the HBM roofline
        # when weights stream; 64 MiB chips (v7x): smaller tiles, 2 TCs.
        block_m = 512 if small_vmem else 1024
    min_row_tiles = 2 if (small_vmem and m >= 16) else 1   # use both v7x TCs

    def pick_bm(target_bm):
        # Number of row tiles first (avoids up to bm-1 dead padded rows), then
        # 256-aligned tile size for the 256x256 MXUs when m is large.
        n_tiles = max(_cdiv(m, target_bm), min_row_tiles)
        align = 256 if (m >= 512 and target_bm >= 256) else 8
        cand = _round_up(_cdiv(m, n_tiles), align)
        return min(cand, _round_up(m, 8))

    def resident_need(bm_):
        tiles = 2 * bm_ * d_model * (x_bytes + out_bytes)              # dbl-buffered x/out
        weights = 2 * 2 * d_model * d_ff * w_bytes + 2 * (d_ff + d_model) * 4
        temps = bm_ * d_ff * 4 + bm_ * d_model * 4                     # f32 h + f32 y
        return tiles + weights + temps + (2 << 20)

    def streamed_need(bm_, bf_):
        tiles = 2 * bm_ * d_model * (x_bytes + out_bytes)
        weights = 2 * 2 * d_model * bf_ * w_bytes + 2 * (bf_ + d_model) * 4
        acc = bm_ * d_model * 4
        temps = bm_ * bf_ * 4
        return tiles + weights + acc + temps + (2 << 20)

    force_streamed = (block_ff is not None) and (block_ff < d_ff)

    # ---- choose path + tile sizes -------------------------------------------
    use_resident = False
    bm = pick_bm(block_m)
    if not force_streamed:
        for target in (block_m, max(block_m // 2, 256), 256):
            cand = pick_bm(target)
            if resident_need(cand) <= vmem_budget:
                bm, use_resident = cand, True
                break

    bf = d_ff
    ff_pad = d_ff
    if not use_resident:
        bf = block_ff if block_ff is not None else 512
        if bf >= d_ff or d_ff <= 256:
            bf = d_ff                       # single chunk: full dim always legal
        else:
            bf = min(max(_round_up(bf, 256), 256), _round_up(d_ff, 256))
        target_bm = block_m
        while True:                          # shrink until we fit the VMEM budget
            bm = pick_bm(target_bm)
            if streamed_need(bm, bf) <= vmem_budget:
                break
            if bf > 256 and bf != d_ff:
                bf = max(_round_up(bf // 2, 256), 256)
            elif target_bm > 256:
                target_bm = max(target_bm // 2, 256)
            else:
                break                        # best effort
        ff_pad = d_ff if bf >= d_ff else _round_up(d_ff, bf)
        if ff_pad != d_ff:
            # Zero padding is exact: relu(0 + 0) = 0 and 0-rows of W2 contribute 0.
            w1 = jnp.pad(w1, ((0, 0), (0, ff_pad - d_ff)))
            b1 = jnp.pad(b1, ((0, 0), (0, ff_pad - d_ff)))
            w2 = jnp.pad(w2, ((0, ff_pad - d_ff), (0, 0)))

    # ---- pad the token axis --------------------------------------------------
    m_pad = _round_up(m, bm)
    if m_pad != m:
        x2d = jnp.pad(x2d, ((0, m_pad - m), (0, 0)))
    grid0 = m_pad // bm

    # ---- build and launch ----------------------------------------------------
    if use_resident:
        kernel = functools.partial(_ffn_resident_kernel, compute_dtype=compute_dtype)
        cost = pl.CostEstimate(
            flops=4 * m_pad * d_model * d_ff,
            bytes_accessed=(m_pad * d_model * (x_bytes + out_bytes)
                            + 2 * d_model * d_ff * w_bytes + (d_ff + d_model) * 4),
            transcendentals=0)
        out2d = pl.pallas_call(
            kernel,
            out_shape=jax.ShapeDtypeStruct((m_pad, d_model), x.dtype),
            grid_spec=pltpu.PrefetchScalarGridSpec(
                num_scalar_prefetch=0,
                grid=(grid0,),
                in_specs=[
                    pl.BlockSpec((bm, d_model),   lambda i: (i, 0)),   # x tile (streamed)
                    pl.BlockSpec((d_model, d_ff), lambda i: (0, 0)),   # W1 (VMEM-resident)
                    pl.BlockSpec((1, d_ff),       lambda i: (0, 0)),   # b1 (resident)
                    pl.BlockSpec((d_ff, d_model), lambda i: (0, 0)),   # W2 (resident)
                    pl.BlockSpec((1, d_model),    lambda i: (0, 0)),   # b2 (resident)
                ],
                out_specs=pl.BlockSpec((bm, d_model), lambda i: (i, 0)),
                scratch_shapes=[],
            ),
            compiler_params=pltpu.CompilerParams(
                dimension_semantics=("parallel",),
                vmem_limit_bytes=int(vmem_budget)),
            cost_estimate=cost,
        )(x2d, w1, b1, w2, b2)
    else:
        grid1 = ff_pad // bf
        kernel = functools.partial(_ffn_streamed_kernel, compute_dtype=compute_dtype)
        if deep_buffer_weights and 2 <= grid1 <= 4 and not small_vmem:
            # Deeper buffering hides the first-chunk weight fetch at each row-tile start.
            w1_spec = pl.BlockSpec((d_model, bf), lambda i, k: (0, k),
                                   pipeline_mode=pl.Buffered(3))
            w2_spec = pl.BlockSpec((bf, d_model), lambda i, k: (k, 0),
                                   pipeline_mode=pl.Buffered(3))
        else:
            w1_spec = pl.BlockSpec((d_model, bf), lambda i, k: (0, k))
            w2_spec = pl.BlockSpec((bf, d_model), lambda i, k: (k, 0))
        cost = pl.CostEstimate(
            flops=4 * m_pad * d_model * ff_pad,
            bytes_accessed=(m_pad * d_model * (x_bytes + out_bytes)
                            + grid0 * (2 * d_model * ff_pad * w_bytes
                                       + (ff_pad + d_model) * 4)),
            transcendentals=0)
        out2d = pl.pallas_call(
            kernel,
            out_shape=jax.ShapeDtypeStruct((m_pad, d_model), x.dtype),
            grid_spec=pltpu.PrefetchScalarGridSpec(
                num_scalar_prefetch=0,
                grid=(grid0, grid1),
                in_specs=[
                    pl.BlockSpec((bm, d_model), lambda i, k: (i, 0)),   # x tile
                    w1_spec,                                            # W1 chunk
                    pl.BlockSpec((1, bf),       lambda i, k: (0, k)),   # b1 chunk
                    w2_spec,                                            # W2 chunk
                    pl.BlockSpec((1, d_model),  lambda i, k: (0, 0)),   # b2
                ],
                out_specs=pl.BlockSpec((bm, d_model), lambda i, k: (i, 0)),
                scratch_shapes=[pltpu.VMEM((bm, d_model), jnp.float32)],
            ),
            compiler_params=pltpu.CompilerParams(
                dimension_semantics=("parallel", "arbitrary"),
                vmem_limit_bytes=int(vmem_budget)),
            cost_estimate=cost,
        )(x2d, w1, b1, w2, b2)

    return out2d[:m].reshape(batch, seq, d_model)


# ----------------------------------------------------------------------------
# Reference / init helpers
# ----------------------------------------------------------------------------

def ffn_reference(x, w1, b1, w2, b2):
    """Pure-JAX reference in full f32 (explicit HIGHEST matmul precision)."""
    hp = jax.lax.Precision.HIGHEST
    h = jnp.maximum(jnp.dot(x, w1, precision=hp) + b1[0], 0.0)
    return jnp.dot(h, w2, precision=hp) + b2[0]


def init_linear_params(key, fan_in, fan_out, dtype=jnp.float32):
    """Deterministic init mimicking nn.Linear: U(-1/sqrt(fan_in), 1/sqrt(fan_in)).
    Weight returned as (fan_in, fan_out) = PyTorch weight transposed."""
    kw, kb = jax.random.split(key)
    bound = 1.0 / math.sqrt(fan_in)
    w = jax.random.uniform(kw, (fan_in, fan_out), dtype, -bound, bound)
    b = jax.random.uniform(kb, (1, fan_out), dtype, -bound, bound)
    return w, b


if __name__ == "__main__":
    key = jax.random.PRNGKey(0)

    # ---- test 1: small demo shapes -> resident-weight kernel, f32 MXU path ----
    batch, seq, d_model, d_ff = 2, 8, 32, 64
    kx, k1, k2, key = jax.random.split(key, 4)
    x = jax.random.normal(kx, (batch, seq, d_model), jnp.float32)
    w1, b1 = init_linear_params(k1, d_model, d_ff)
    w2, b2 = init_linear_params(k2, d_ff, d_model)

    out = jax.block_until_ready(position_wise_feed_forward(x, w1, b1, w2, b2))
    ref = ffn_reference(x, w1, b1, w2, b2)
    assert out.shape == x.shape
    assert jnp.allclose(out, ref, atol=1e-3, rtol=1e-3), "mismatch (resident f32 path)"

    # ---- test 2: forces the streamed (d_ff-chunked) kernel + bf16 MXU path ----
    batch2, seq2, dm2, dff2 = 2, 64, 256, 512
    kx2, k12, k22, key = jax.random.split(key, 4)
    x2 = jax.random.normal(kx2, (batch2, seq2, dm2), jnp.float32)
    w12, b12 = init_linear_params(k12, dm2, dff2)
    w22, b22 = init_linear_params(k22, dff2, dm2)

    out2 = jax.block_until_ready(
        position_wise_feed_forward(x2, w12, b12, w22, b22, block_ff=256))
    ref2 = ffn_reference(x2, w12, b12, w22, b22)
    assert out2.shape == x2.shape
    # bf16 MXU operands with f32 accumulation vs full-f32 reference -> loose tol.
    assert jnp.allclose(out2, ref2, atol=5e-2, rtol=5e-2), "mismatch (streamed bf16 path)"

    print("KERNEL_OK")
</pallas_src>

<mosaic_0001>
module attributes {stable_mosaic.version = 11 : i64} {
  func.func @_ffn_resident_kernel(%arg0: i32, %arg1: memref<16x32xf32, #tpu.memory_space<vmem>>, %arg2: memref<32x64xf32, #tpu.memory_space<vmem>>, %arg3: memref<1x64xf32, #tpu.memory_space<vmem>>, %arg4: memref<64x32xf32, #tpu.memory_space<vmem>>, %arg5: memref<1x32xf32, #tpu.memory_space<vmem>>, %arg6: memref<16x32xf32, #tpu.memory_space<vmem>>) attributes {dimension_semantics = [#tpu.dimension_semantics<parallel>], iteration_bounds = array<i64: 1>, scalar_prefetch = 0 : i64, scratch_operands = 0 : i64, tpu.core_type = #tpu.core_type<tc>, window_params = [{transform_indices = @transform_0, window_bounds = array<i64: 16, 32>}, {pipeline_mode = #tpu.pipeline_mode<synchronous>, transform_indices = @transform_1, window_bounds = array<i64: 32, 64>}, {pipeline_mode = #tpu.pipeline_mode<synchronous>, transform_indices = @transform_2, window_bounds = array<i64: 1, 64>}, {pipeline_mode = #tpu.pipeline_mode<synchronous>, transform_indices = @transform_3, window_bounds = array<i64: 64, 32>}, {pipeline_mode = #tpu.pipeline_mode<synchronous>, transform_indices = @transform_4, window_bounds = array<i64: 1, 32>}, {transform_indices = @transform_5, window_bounds = array<i64: 16, 32>}]} {
    %c0 = arith.constant 0 : index
    %c0_0 = arith.constant 0 : index
    %0 = vector.load %arg1[%c0, %c0_0] : memref<16x32xf32, #tpu.memory_space<vmem>>, vector<16x32xf32>
    %c0_1 = arith.constant 0 : index
    %c0_2 = arith.constant 0 : index
    %1 = vector.load %arg2[%c0_1, %c0_2] : memref<32x64xf32, #tpu.memory_space<vmem>>, vector<32x64xf32>
    %cst = arith.constant dense<0.000000e+00> : vector<16x64xf32>
    %2 = tpu.matmul %0, %1, %cst {dimension_numbers = #tpu.dot_dimension_numbers<[1], [0], [0], [1], [0, 0, 1, 1], [], []>} : vector<16x32xf32>, vector<32x64xf32>, vector<16x64xf32> -> vector<16x64xf32>
    %c0_3 = arith.constant 0 : index
    %c0_4 = arith.constant 0 : index
    %3 = vector.load %arg3[%c0_3, %c0_4] : memref<1x64xf32, #tpu.memory_space<vmem>>, vector<1x64xf32>
    %4 = vector.broadcast %3 : vector<1x64xf32> to vector<16x64xf32>
    %5 = arith.addf %2, %4 : vector<16x64xf32>
    %cst_5 = arith.constant 0.000000e+00 : f32
    %6 = vector.broadcast %cst_5 : f32 to vector<16x64xf32>
    %7 = arith.maximumf %5, %6 : vector<16x64xf32>
    %c0_6 = arith.constant 0 : index
    %c0_7 = arith.constant 0 : index
    %8 = vector.load %arg4[%c0_6, %c0_7] : memref<64x32xf32, #tpu.memory_space<vmem>>, vector<64x32xf32>
    %cst_8 = arith.constant dense<0.000000e+00> : vector<16x32xf32>
    %9 = tpu.matmul %7, %8, %cst_8 {dimension_numbers = #tpu.dot_dimension_numbers<[1], [0], [0], [1], [0, 0, 1, 1], [], []>} : vector<16x64xf32>, vector<64x32xf32>, vector<16x32xf32> -> vector<16x32xf32>
    %c0_9 = arith.constant 0 : index
    %c0_10 = arith.constant 0 : index
    %10 = vector.load %arg5[%c0_9, %c0_10] : memref<1x32xf32, #tpu.memory_space<vmem>>, vector<1x32xf32>
    %11 = vector.broadcast %10 : vector<1x32xf32> to vector<16x32xf32>
    %12 = arith.addf %9, %11 : vector<16x32xf32>
    %c0_11 = arith.constant 0 : index
    %c0_12 = arith.constant 0 : index
    %13 = vector.load %arg6[%c0_11, %c0_12] : memref<16x32xf32, #tpu.memory_space<vmem>>, vector<16x32xf32>
    tpu.vector_store %arg6[%c0_11, %c0_12], %12 {strides = array<i32>} : memref<16x32xf32, #tpu.memory_space<vmem>>, vector<16x32xf32>,
    return
  }
  func.func @transform_0(%arg0: i32) -> (i32, i32) {
    %c0_i32 = arith.constant 0 : i32
    %c0_i32_0 = arith.constant 0 : i32
    return %arg0, %c0_i32 : i32, i32
  }
  func.func @transform_1(%arg0: i32) -> (i32, i32) {
    %c0_i32 = arith.constant 0 : i32
    %c0_i32_0 = arith.constant 0 : i32
    %c0_i32_1 = arith.constant 0 : i32
    return %c0_i32, %c0_i32_0 : i32, i32
  }
  func.func @transform_2(%arg0: i32) -> (i32, i32) {
    %c0_i32 = arith.constant 0 : i32
    %c0_i32_0 = arith.constant 0 : i32
    %c0_i32_1 = arith.constant 0 : i32
    return %c0_i32, %c0_i32_0 : i32, i32
  }
  func.func @transform_3(%arg0: i32) -> (i32, i32) {
    %c0_i32 = arith.constant 0 : i32
    %c0_i32_0 = arith.constant 0 : i32
    %c0_i32_1 = arith.constant 0 : i32
    return %c0_i32, %c0_i32_0 : i32, i32
  }
  func.func @transform_4(%arg0: i32) -> (i32, i32) {
    %c0_i32 = arith.constant 0 : i32
    %c0_i32_0 = arith.constant 0 : i32
    %c0_i32_1 = arith.constant 0 : i32
    return %c0_i32, %c0_i32_0 : i32, i32
  }
  func.func @transform_5(%arg0: i32) -> (i32, i32) {
    %c0_i32 = arith.constant 0 : i32
    %c0_i32_0 = arith.constant 0 : i32
    return %arg0, %c0_i32 : i32, i32
  }
}

</mosaic_0001>

<llo_original>
// kernel: tpu_custom_call.1
$region0: #{tpu_custom_call.1}
  #allocation0 [shape = 'u32[]', space=smem, size = 0x4, offset = 0x4, fixed_abs, tag = 'smem constant byte address 0x4 - core index']
  #allocation1 [shape = 'u32[144,128]{1,0:T(1,128)}', space=vmem, size = 0x12000, scoped, tag = 'internal scratch']
  %s0 = inlined_call_operand.hbm [shape: f32[16,32], index: 0, kind: input, shape index: {}]
  %s1 = inlined_call_operand.hbm [shape: f32[32,64], index: 1, kind: input, shape index: {}]
  %s2 = inlined_call_operand.hbm [shape: f32[1,64], index: 2, kind: input, shape index: {}]
  %s3 = inlined_call_operand.hbm [shape: f32[64,32], index: 3, kind: input, shape index: {}]
  %s4 = inlined_call_operand.hbm [shape: f32[1,32], index: 4, kind: input, shape index: {}]
  %s5 = inlined_call_operand.hbm [shape: f32[16,32], index: 5, kind: output, shape index: {}]
  %s6 = sld [smem:[#allocation0]]
  $region50: #{tpu_custom_call.1} parent=0
    _
  %s8 = ssub.s32 1, %s6
  %s9 = scalar_select 0, %s8, %s6
  $region1: #{tpu_custom_call.1} parent=0
    #allocation2 [shape = 'u8[8192]{0}', space=vmem, size = 0x2000, scoped, tag = 'input window, operand 0, single buffered']
    #allocation3 [shape = 's32[1]{0}', space=sflag, size = 0x4, scoped, tag = 'scoped memory for tpu_custom_call.1']
    #allocation4 [shape = 's32[1]{0}', space=sflag, size = 0x4, scoped, tag = 'scoped memory for tpu_custom_call.1']
    #allocation5 [shape = 'u8[16384]{0}', space=vmem, size = 0x4000, scoped, tag = 'input window, operand 1, single buffered']
    #allocation6 [shape = 's32[1]{0}', space=sflag, size = 0x4, scoped, tag = 'scoped memory for tpu_custom_call.1']
    #allocation7 [shape = 'u8[512]{0}', space=vmem, size = 0x400, scoped, tag = 'input window, operand 2, single buffered']
    #allocation8 [shape = 'u8[32768]{0}', space=vmem, size = 0x8000, scoped, tag = 'input window, operand 3, single buffered']
    #allocation9 [shape = 's32[1]{0}', space=sflag, size = 0x4, scoped, tag = 'scoped memory for tpu_custom_call.1']
    #allocation10 [shape = 'u8[512]{0}', space=vmem, size = 0x400, scoped, tag = 'input window, operand 4, single buffered']
    #allocation11 [shape = 'u8[8192]{0}', space=vmem, size = 0x2000, scoped, tag = 'output window, operand 0, single buffered']
    %10 = vsyncpa [#allocation3], 0
    %11 = vsyncpa [#allocation6], 0
    %12 = vsyncpa [#allocation9], 0
    %13 = vsyncpa [#allocation4], 0
    // Predicated region
    $region2: #{tpu_custom_call.1} parent=1 // pred_check
      _
    $region3: #{tpu_custom_call.1} parent=1 // pred_check_branch
      %15 = sbr.rel (0) target = $region5
    $region4: #{tpu_custom_call.1} parent=1 // pred_region
      %s17 = ssub.s32 256, 256
      %18 = vsyncadd [#allocation3], %s17
      %s19 = sshll.u32 [#allocation2], 4
      %s20 = int_to_ptr.vmem [resolvable:$true] %s19
      %25 = dma.hbm_to_vmem [thread:$0]  %s0, 256, %s20, [#allocation3], 128, 128, 8
    $region5: #{tpu_custom_call.1} parent=1 // pred_fallthru
      _
    // Predicated region
    $region6: #{tpu_custom_call.1} parent=1 // pred_check
      _
    $region7: #{tpu_custom_call.1} parent=1 // pred_check_branch
      %27 = sbr.rel (0) target = $region9
    $region8: #{tpu_custom_call.1} parent=1 // pred_region
      %s29 = ssub.s32 512, 512
      %30 = vsyncadd [#allocation6], %s29
      %s31 = sshll.u32 [#allocation5], 4
      %s32 = int_to_ptr.vmem [resolvable:$true] %s31
      %37 = dma.hbm_to_vmem [thread:$0]  %s1, 512, %s32, [#allocation6], 128, 128, 8
    $region9: #{tpu_custom_call.1} parent=1 // pred_fallthru
      _
    // Predicated region
    $region10: #{tpu_custom_call.1} parent=1 // pred_check
      _
    $region11: #{tpu_custom_call.1} parent=1 // pred_check_branch
      %39 = sbr.rel (0) target = $region13
    $region12: #{tpu_custom_call.1} parent=1 // pred_region
      %s41 = ssub.s32 16, 16
      %42 = vsyncadd [#allocation6], %s41
      %s44 = sshll.u32 [#allocation7], 4
      %s45 = int_to_ptr.vmem [resolvable:$true] %s44
      %47 = dma.hbm_to_vmem [thread:$0]  %s2, 16, %s45, [#allocation6]
    $region13: #{tpu_custom_call.1} parent=1 // pred_fallthru
      _
    // Predicated region
    $region14: #{tpu_custom_call.1} parent=1 // pred_check
      _
    $region15: #{tpu_custom_call.1} parent=1 // pred_check_branch
      %49 = sbr.rel (0) target = $region17
    $region16: #{tpu_custom_call.1} parent=1 // pred_region
      %s51 = ssub.s32 1024, 1024
      %52 = vsyncadd [#allocation9], %s51
      %s53 = sshll.u32 [#allocation8], 4
      %s54 = int_to_ptr.vmem [resolvable:$true] %s53
      %59 = dma.hbm_to_vmem [thread:$0]  %s3, 1024, %s54, [#allocation9], 128, 128, 8
    $region17: #{tpu_custom_call.1} parent=1 // pred_fallthru
      _
    // Predicated region
    $region18: #{tpu_custom_call.1} parent=1 // pred_check
      _
    $region19: #{tpu_custom_call.1} parent=1 // pred_check_branch
      %61 = sbr.rel (0) target = $region21
    $region20: #{tpu_custom_call.1} parent=1 // pred_region
      %s63 = ssub.s32 16, 16
      %64 = vsyncadd [#allocation9], %s63
      %s66 = sshll.u32 [#allocation10], 4
      %s67 = int_to_ptr.vmem [resolvable:$true] %s66
      %69 = dma.hbm_to_vmem [thread:$0]  %s4, 16, %s67, [#allocation9]
    $region21: #{tpu_custom_call.1} parent=1 // pred_fallthru
      _
    // Predicated region
    $region22: #{tpu_custom_call.1} parent=1 // pred_check
      _
    $region23: #{tpu_custom_call.1} parent=1 // pred_check_branch
      %71 = sbr.rel (0) target = $region25
    $region24: #{tpu_custom_call.1} parent=1 // pred_region
      %72 = dma.done [#allocation3], 256
    $region25: #{tpu_custom_call.1} parent=1 // pred_fallthru
      _
    // Predicated region
    $region26: #{tpu_custom_call.1} parent=1 // pred_check
      _
    $region27: #{tpu_custom_call.1} parent=1 // pred_check_branch
      %74 = sbr.rel (0) target = $region29
    $region28: #{tpu_custom_call.1} parent=1 // pred_region
      %75 = dma.done [#allocation6], 512
    $region29: #{tpu_custom_call.1} parent=1 // pred_fallthru
      _
    // Predicated region
    $region30: #{tpu_custom_call.1} parent=1 // pred_check
      _
    $region31: #{tpu_custom_call.1} parent=1 // pred_check_branch
      %77 = sbr.rel (0) target = $region33
    $region32: #{tpu_custom_call.1} parent=1 // pred_region
      %78 = dma.done [#allocation6], 16
    $region33: #{tpu_custom_call.1} parent=1 // pred_fallthru
      _
    // Predicated region
    $region34: #{tpu_custom_call.1} parent=1 // pred_check
      _
    $region35: #{tpu_custom_call.1} parent=1 // pred_check_branch
      %80 = sbr.rel (0) target = $region37
    $region36: #{tpu_custom_call.1} parent=1 // pred_region
      %81 = dma.done [#allocation9], 1024
    $region37: #{tpu_custom_call.1} parent=1 // pred_fallthru
      _
    // Predicated region
    $region38: #{tpu_custom_call.1} parent=1 // pred_check
      _
    $region39: #{tpu_custom_call.1} parent=1 // pred_check_branch
      %83 = sbr.rel (0) target = $region41
    $region40: #{tpu_custom_call.1} parent=1 // pred_region
      %84 = dma.done [#allocation9], 16
    $region41: #{tpu_custom_call.1} parent=1 // pred_fallthru
      _
    %v85 = vld [vmem:[#allocation2] sm:$0xff]
    %v86 = vld [vmem:[#allocation2 + $0x8] sm:$0xff]
    %v87 = vld [vmem:[#allocation5] sm:$0xff]
    %v88 = vld [vmem:[#allocation5 + $0x8] sm:$0xff]
    %v89 = vld [vmem:[#allocation5 + $0x10] sm:$0xff]
    %v90 = vld [vmem:[#allocation5 + $0x18] sm:$0xff]
    %v91 = vld [vmem:[#allocation7] sm:$0x1]
    %v93 = vlaneseq
    %v94 = vshrl.u32 %v93, 7
    %v95 = vsub.s32 0, %v94
    %v96 = vrot.slane %v91, %v95
    %vm98 = vcmask 261120
    %v100 = vsel %vm98, %v85, 0
    %v103 = vsel %vm98, %v86, 0
    %105 = vmatprep.subr.mxu0 0.0
    %106 = vmatpush1.msra.mxu0 %v87
    %107 = vmatprep.subr.mxu0 0.0
    %108 = vmatpush1.msra.mxu0 %v88
    %109 = vmatprep.subr.mxu0 0.0
    %110 = vmatpush1.msra.mxu0 %v89
    %111 = vmatprep.subr.mxu0 0.0
    %112 = vmatpush1.msra.mxu0 %v90
    %113 = vmatprep.subr.mxu0 0.0
    %114 = vmatpush1.msra.mxu0 0.0
    %115 = vmatprep.subr.mxu0 0.0
    %116 = vmatpush1.msra.mxu0 0.0
    %117 = vmatprep.subr.mxu0 0.0
    %118 = vmatpush1.msra.mxu0 0.0
    %119 = vmatprep.subr.mxu0 0.0
    %120 = vmatpush1.msra.mxu0 0.0
    %121 = vmatprep.subr.mxu0 0.0
    %122 = vmatpush1.msra.mxu0 0.0
    %123 = vmatprep.subr.mxu0 0.0
    %124 = vmatpush1.msra.mxu0 0.0
    %125 = vmatprep.subr.mxu0 0.0
    %126 = vmatpush1.msra.mxu0 0.0
    %127 = vmatprep.subr.mxu0 0.0
    %128 = vmatpush1.msra.mxu0 0.0
    %129 = vmatprep.subr.mxu0 0.0
    %130 = vmatpush1.msra.mxu0 0.0
    %131 = vmatprep.subr.mxu0 0.0
    %132 = vmatpush1.msra.mxu0 0.0
    %133 = vmatprep.subr.mxu0 0.0
    %134 = vmatpush1.msra.mxu0 0.0
    %135 = vmatprep.subr.mxu0 0.0
    %136 = vmatpush1.msra.mxu0 0.0
    %137 = vmatprep.subr.mxu0 0.0
    %138 = vmatpush1.msra.mxu0 0.0
    %139 = vmatprep.subr.mxu0 0.0
    %140 = vmatpush1.msra.mxu0 0.0
    %141 = vmatprep.subr.mxu0 0.0
    %142 = vmatpush1.msra.mxu0 0.0
    %143 = vmatprep.subr.mxu0 0.0
    %144 = vmatpush1.msra.mxu0 0.0
    %145 = vmatprep.subr.mxu0 0.0
    %146 = vmatpush1.msra.mxu0 0.0
    %147 = vmatprep.subr.mxu0 0.0
    %148 = vmatpush1.msra.mxu0 0.0
    %149 = vmatprep.subr.mxu0 0.0
    %150 = vmatpush1.msra.mxu0 0.0
    %151 = vmatprep.subr.mxu0 0.0
    %152 = vmatpush1.msra.mxu0 0.0
    %153 = vmatprep.subr.mxu0 0.0
    %154 = vmatpush1.msra.mxu0 0.0
    %155 = vmatprep.subr.mxu0 0.0
    %156 = vmatpush1.msra.mxu0 0.0
    %157 = vmatprep.subr.mxu0 0.0
    %158 = vmatpush1.msra.mxu0 0.0
    %159 = vmatprep.subr.mxu0 0.0
    %160 = vmatpush1.msra.mxu0 0.0
    %161 = vmatprep.subr.mxu0 0.0
    %162 = vmatpush1.msra.mxu0 0.0
    %163 = vmatprep.subr.mxu0 0.0
    %164 = vmatpush1.msra.mxu0 0.0
    %165 = vmatprep.subr.mxu0 0.0
    %166 = vmatpush1.msra.mxu0 0.0
    %167 = vmatprep.subr.mxu0 0.0
    %168 = vmatpush1.msra.mxu0 0.0
    %169 = vmatprep.mubr.f32.mxu0 0.0
    %170 = vmatmul.mubr.f32.gmra.mrb[0].mxu0 %v100
    %v171 = vpop.f32.mrb[0].mxu0
    %v172 = vadd.f32 %v96, %v171
    %v173 = vpop.f32.mrb[0].mxu0
    %174 = vmatprep.mubr.f32.mxu0 0.0
    %175 = vmatmul.mubr.f32.gmra.mrb[0].mxu0 %v103
    %v176 = vpop.f32.mrb[0].mxu0
    %v177 = vadd.f32 %v96, %v176
    %v178 = vpop.f32.mrb[0].mxu0
    %179 = vdwg.mxu0
    %v180 = vmax.f32 %v172, 0.0
    %v181 = vmax.f32 %v177, 0.0
    %v182 = vld [vmem:[#allocation8] sm:$0xff]
    %v183 = vld [vmem:[#allocation8 + $0x8] sm:$0xff]
    %v184 = vld [vmem:[#allocation8 + $0x10] sm:$0xff]
    %v185 = vld [vmem:[#allocation8 + $0x18] sm:$0xff]
    %v186 = vld [vmem:[#allocation8 + $0x20] sm:$0xff]
    %v187 = vld [vmem:[#allocation8 + $0x28] sm:$0xff]
    %v188 = vld [vmem:[#allocation8 + $0x30] sm:$0xff]
    %v189 = vld [vmem:[#allocation8 + $0x38] sm:$0xff]
    %v190 = vld [vmem:[#allocation10] sm:$0x1]
    %v192 = vlaneseq
    %v193 = vshrl.u32 %v192, 7
    %v194 = vsub.s32 0, %v193
    %v195 = vrot.slane %v190, %v194
    %vm197 = vcmask 523264
    %v199 = vsel %vm197, %v180, 0
    %v202 = vsel %vm197, %v181, 0
    %204 = vmatprep.subr.mxu0 0.0
    %205 = vmatpush1.msra.mxu0 %v182
    %206 = vmatprep.subr.mxu0 0.0
    %207 = vmatpush1.msra.mxu0 %v183
    %208 = vmatprep.subr.mxu0 0.0
    %209 = vmatpush1.msra.mxu0 %v184
    %210 = vmatprep.subr.mxu0 0.0
    %211 = vmatpush1.msra.mxu0 %v185
    %212 = vmatprep.subr.mxu0 0.0
    %213 = vmatpush1.msra.mxu0 %v186
    %214 = vmatprep.subr.mxu0 0.0
    %215 = vmatpush1.msra.mxu0 %v187
    %216 = vmatprep.subr.mxu0 0.0
    %217 = vmatpush1.msra.mxu0 %v188
    %218 = vmatprep.subr.mxu0 0.0
    %219 = vmatpush1.msra.mxu0 %v189
    %220 = vmatprep.subr.mxu0 0.0
    %221 = vmatpush1.msra.mxu0 0.0
    %222 = vmatprep.subr.mxu0 0.0
    %223 = vmatpush1.msra.mxu0 0.0
    %224 = vmatprep.subr.mxu0 0.0
    %225 = vmatpush1.msra.mxu0 0.0
    %226 = vmatprep.subr.mxu0 0.0
    %227 = vmatpush1.msra.mxu0 0.0
    %228 = vmatprep.subr.mxu0 0.0
    %229 = vmatpush1.msra.mxu0 0.0
    %230 = vmatprep.subr.mxu0 0.0
    %231 = vmatpush1.msra.mxu0 0.0
    %232 = vmatprep.subr.mxu0 0.0
    %233 = vmatpush1.msra.mxu0 0.0
    %234 = vmatprep.subr.mxu0 0.0
    %235 = vmatpush1.msra.mxu0 0.0
    %236 = vmatprep.subr.mxu0 0.0
    %237 = vmatpush1.msra.mxu0 0.0
    %238 = vmatprep.subr.mxu0 0.0
    %239 = vmatpush1.msra.mxu0 0.0
    %240 = vmatprep.subr.mxu0 0.0
    %241 = vmatpush1.msra.mxu0 0.0
    %242 = vmatprep.subr.mxu0 0.0
    %243 = vmatpush1.msra.mxu0 0.0
    %244 = vmatprep.subr.mxu0 0.0
    %245 = vmatpush1.msra.mxu0 0.0
    %246 = vmatprep.subr.mxu0 0.0
    %247 = vmatpush1.msra.mxu0 0.0
    %248 = vmatprep.subr.mxu0 0.0
    %249 = vmatpush1.msra.mxu0 0.0
    %250 = vmatprep.subr.mxu0 0.0
    %251 = vmatpush1.msra.mxu0 0.0
    %252 = vmatprep.subr.mxu0 0.0
    %253 = vmatpush1.msra.mxu0 0.0
    %254 = vmatprep.subr.mxu0 0.0
    %255 = vmatpush1.msra.mxu0 0.0
    %256 = vmatprep.subr.mxu0 0.0
    %257 = vmatpush1.msra.mxu0 0.0
    %258 = vmatprep.subr.mxu0 0.0
    %259 = vmatpush1.msra.mxu0 0.0
    %260 = vmatprep.subr.mxu0 0.0
    %261 = vmatpush1.msra.mxu0 0.0
    %262 = vmatprep.subr.mxu0 0.0
    %263 = vmatpush1.msra.mxu0 0.0
    %264 = vmatprep.subr.mxu0 0.0
    %265 = vmatpush1.msra.mxu0 0.0
    %266 = vmatprep.subr.mxu0 0.0
    %267 = vmatpush1.msra.mxu0 0.0
    %268 = vmatprep.mubr.f32.mxu0 0.0
    %269 = vmatmul.mubr.f32.gmra.mrb[0].mxu0 %v199
    %v270 = vpop.f32.mrb[0].mxu0
    %v271 = vadd.f32 %v195, %v270
    %v272 = vpop.f32.mrb[0].mxu0
    %273 = vmatprep.mubr.f32.mxu0 0.0
    %274 = vmatmul.mubr.f32.gmra.mrb[0].mxu0 %v202
    %v275 = vpop.f32.mrb[0].mxu0
    %v276 = vadd.f32 %v195, %v275
    %v277 = vpop.f32.mrb[0].mxu0
    %278 = vdwg.mxu0
    %279 = vst.msk [vmem:[#allocation11] sm:$0xff] %vm98, %v271
    %280 = vst.msk [vmem:[#allocation11 + $0x8] sm:$0xff] %vm98, %v276
    // Predicated region
    $region42: #{tpu_custom_call.1} parent=1 // pred_check
      _
    $region43: #{tpu_custom_call.1} parent=1 // pred_check_branch
      %282 = sbr.rel (0) target = $region45
    $region44: #{tpu_custom_call.1} parent=1 // pred_region
      %s284 = ssub.s32 256, 256
      %285 = vsyncadd [#allocation4], %s284
      %s286 = sshll.u32 [#allocation11], 4
      %s287 = int_to_ptr.vmem [resolvable:$true] %s286
      %292 = dma.vmem_to_hbm [thread:$0]  %s287, 256, %s5, [#allocation4], 128, 128, 8
    $region45: #{tpu_custom_call.1} parent=1 // pred_fallthru
      _
    // Predicated region
    $region46: #{tpu_custom_call.1} parent=1 // pred_check
      _
    $region47: #{tpu_custom_call.1} parent=1 // pred_check_branch
      %294 = sbr.rel (0) target = $region49
    $region48: #{tpu_custom_call.1} parent=1 // pred_region
      %295 = dma.done [#allocation4], 256
    $region49: #{tpu_custom_call.1} parent=1 // pred_fallthru
      _
    %296 = vsyncpa [#allocation3], 1
    %297 = vsyncpa [#allocation6], 1
    %298 = vsyncpa [#allocation9], 1
    %299 = vsyncpa [#allocation4], 1

</llo_original>
